<compile_context>
chip_gen: v7x
topology: tpu7x:2x2x1
jax: 0.10.0
libtpu: 0.0.40
codegen_flags: <defaults>
</compile_context>

<pallas_src>
import jax
import jax.numpy as jnp
from jax.experimental import pallas as pl
from jax.experimental.pallas import tpu as pltpu

LN_EPS = 1e-5      # torch.nn.LayerNorm default
LANE = 128
TILE_B_MAX = 256   # MXU M tile on v6e/v7x; use 128 on v5e (4x128^2 MXU)


def _round_up(n, m):
    return (n + m - 1) // m * m


def _fused_heads_kernel(x_ref, w1_ref, vec_ref, avg_ref, w2_ref, b2_ref, o_ref):
    """All heads of all categories fused: Linear -> per-head LayerNorm -> ReLU -> Linear."""
    x = x_ref[...].astype(jnp.float32)                    # clip_features.float()

    # Linear 1 for every head at once: (TB, C) @ (C, NH) -> (TB, NH)   (MXU)
    h = jnp.dot(x, w1_ref[...], preferred_element_type=jnp.float32)
    vec = vec_ref[...]                                     # rows: b1, gamma, beta
    h = h + vec[0:1, :]

    # Per-head LayerNorm statistics in ONE matmul: stack [h ; h*h] along the
    # sublane axis and hit the block-diagonal 1/H averaging matrix once.
    tb = h.shape[0]
    stacked = jnp.concatenate([h, h * h], axis=0)          # (2*TB, NH)
    stats = jnp.dot(stacked, avg_ref[...], preferred_element_type=jnp.float32)
    mean = stats[:tb, :]
    var = stats[tb:, :] - mean * mean                      # E[h^2] - mean^2 (biased)
    hn = (h - mean) * jax.lax.rsqrt(var + LN_EPS) * vec[1:2, :] + vec[2:3, :]

    # ReLU (VPU).  Dropout is identity in eval mode.
    hr = jnp.maximum(hn, 0.0)

    # Linear 2 for every head at once via block-diagonal W2:
    # (TB, NH) @ (NH, A_pad) -> (TB, A_pad)   (MXU, lane-dense output)
    o_ref[...] = (jnp.dot(hr, w2_ref[...], preferred_element_type=jnp.float32)
                  + b2_ref[...])


def init_predictor_params(key, clip_dim, category_attributes, attribute_dims,
                          hidden_dim=32, num_hidden_layers=1):
    """Deterministic synthetic parameters matching the PyTorch module's shapes."""
    # TODO(synk): num_hidden_layers > 1 adds extra (Linear, LayerNorm) blocks with
    # halving hidden dims; only the default num_hidden_layers=1 path is built here.
    assert num_hidden_layers == 1
    params = {}
    for category, attributes in category_attributes.items():
        for attr_name in attributes.keys():
            k = f"{category}_{attr_name}"
            if k not in attribute_dims:
                continue
            key, k1, k2, k3, k4 = jax.random.split(key, 5)
            a_dim = attribute_dims[k]
            params[k] = {
                "w1": jax.random.normal(k1, (clip_dim, hidden_dim), jnp.float32) * 0.05,
                "b1": jax.random.normal(k2, (1, hidden_dim), jnp.float32) * 0.01,
                "gamma": jnp.ones((1, hidden_dim), jnp.float32),
                "beta": jnp.zeros((1, hidden_dim), jnp.float32),
                "w2": jax.random.normal(k3, (hidden_dim, a_dim), jnp.float32) * 0.05,
                "b2": jax.random.normal(k4, (1, a_dim), jnp.float32) * 0.01,
            }
    return params


def pack_all_heads(params, category_attributes, hidden_dim):
    """Pack EVERY head of EVERY category into one fused set of kernel operands."""
    keys, cat_of = [], []
    for category, attributes in category_attributes.items():
        for attr_name in attributes.keys():
            k = f"{category}_{attr_name}"
            if k in params:
                keys.append(k)
                cat_of.append(category)
    assert keys, "no attribute heads found"

    H = hidden_dim
    n = len(keys)

    w1 = jnp.concatenate([params[k]["w1"] for k in keys], axis=1)        # (C, NH)
    b1 = jnp.concatenate([params[k]["b1"] for k in keys], axis=1)        # (1, NH)
    g = jnp.concatenate([params[k]["gamma"] for k in keys], axis=1)      # (1, NH)
    beta = jnp.concatenate([params[k]["beta"] for k in keys], axis=1)    # (1, NH)
    vec = jnp.concatenate([b1, g, beta], axis=0)                         # (3, NH)

    # Block-diagonal per-head averaging matrix (1/H inside each head's HxH block).
    # TODO(synk): for many heads (NH >> 128) factor this into (NH,n)@(n,NH) to
    # avoid O(NH^2) VMEM/FLOPs; dense is cheaper here (3 heads, NH=96).
    ids = jnp.repeat(jnp.arange(n), H)
    avg = (ids[:, None] == ids[None, :]).astype(jnp.float32) / float(H)  # (NH, NH)

    a_dims = [params[k]["w2"].shape[1] for k in keys]
    a_total = sum(a_dims)
    a_pad = max(_round_up(a_total, LANE), LANE)                          # lane-dense out

    w2 = jnp.zeros((n * H, a_pad), jnp.float32)
    b2 = jnp.zeros((1, a_pad), jnp.float32)
    layout = {c: [] for c in category_attributes}
    off = 0
    for i, (k, c) in enumerate(zip(keys, cat_of)):
        a = a_dims[i]
        w2 = w2.at[i * H:(i + 1) * H, off:off + a].set(params[k]["w2"])
        b2 = b2.at[:, off:off + a].set(params[k]["b2"])
        layout[c].append((k, off, a))
        off += a
    layout = {c: tuple(v) for c, v in layout.items()}

    return {"w1": w1, "vec": vec, "avg": avg, "w2": w2, "b2": b2, "layout": layout}


@jax.jit
def _predict_slab(x, w1, vec, avg, w2, b2):
    """One pallas_call computing logits of every head for the whole batch."""
    B, C = x.shape
    NH = w1.shape[1]
    A_pad = w2.shape[1]

    # Pad batch to the f32 sublane (8) and tile it (parallel grid -> both TCs
    # on v7x for large B; weights stay VMEM-resident via constant index_maps).
    tile_b = min(TILE_B_MAX, _round_up(B, 8))
    pad_b = _round_up(B, tile_b)
    if pad_b != B:
        x = jnp.pad(x, ((0, pad_b - B), (0, 0)))
    grid = (pad_b // tile_b,)

    flops = 2 * pad_b * (C * NH + 2 * NH * NH + NH * A_pad) + 8 * pad_b * NH
    bytes_accessed = (pad_b * C * x.dtype.itemsize
                      + 4 * (w1.size + vec.size + avg.size + w2.size + b2.size)
                      + pad_b * A_pad * 4)

    slab = pl.pallas_call(
        _fused_heads_kernel,
        out_shape=jax.ShapeDtypeStruct((pad_b, A_pad), jnp.float32),
        grid_spec=pltpu.PrefetchScalarGridSpec(
            num_scalar_prefetch=0,
            grid=grid,
            in_specs=[
                pl.BlockSpec((tile_b, C), lambda i: (i, 0)),   # x: tiled over batch
                pl.BlockSpec((C, NH), lambda i: (0, 0)),       # w1: resident
                pl.BlockSpec((3, NH), lambda i: (0, 0)),       # b1/gamma/beta: resident
                pl.BlockSpec((NH, NH), lambda i: (0, 0)),      # avg: resident
                pl.BlockSpec((NH, A_pad), lambda i: (0, 0)),   # w2: resident
                pl.BlockSpec((1, A_pad), lambda i: (0, 0)),    # b2: resident
            ],
            out_specs=pl.BlockSpec((tile_b, A_pad), lambda i: (i, 0)),
        ),
        compiler_params=pltpu.CompilerParams(
            dimension_semantics=("parallel",)),
        cost_estimate=pl.CostEstimate(flops=int(flops),
                                      transcendentals=int(pad_b * NH),
                                      bytes_accessed=int(bytes_accessed)),
    )(x, w1, vec, avg, w2, b2)
    return slab[:B]


def category_aware_attribute_predictor(clip_features, category, packed):
    """Mirrors CategoryAwareAttributePredictor.forward: returns dict of logits."""
    slab = _predict_slab(clip_features, packed["w1"], packed["vec"],
                         packed["avg"], packed["w2"], packed["b2"])
    # Static-offset slices of the lane-dense slab (cheap; lazy device slices).
    return {k: slab[:, off:off + a] for (k, off, a) in packed["layout"][category]}


if __name__ == "__main__":
    # Small, self-consistent config.
    batch = 2
    clip_dim = 32
    hidden_dim = 32
    category_attributes = {
        "shirt": {"color": None, "sleeve_length": None},
        "pants": {"fit": None},
    }
    attribute_dims = {
        "shirt_color": 8,
        "shirt_sleeve_length": 5,
        "pants_fit": 4,
    }

    root = jax.random.PRNGKey(0)
    k_params, k_x = jax.random.split(root)
    params = init_predictor_params(k_params, clip_dim, category_attributes,
                                   attribute_dims, hidden_dim=hidden_dim)
    clip_features = jax.random.normal(k_x, (batch, clip_dim), jnp.float32)

    # Pack ALL categories' heads once (setup time, outside the kernel).
    packed = pack_all_heads(params, category_attributes, hidden_dim)

    out = category_aware_attribute_predictor(clip_features, "shirt", packed)
    for v in out.values():
        jax.block_until_ready(v)

    # Quick sanity check against a plain-JAX per-head reference.
    def _ref_head(x, p):
        h = x.astype(jnp.float32) @ p["w1"] + p["b1"]
        m = h.mean(-1, keepdims=True)
        v = ((h - m) ** 2).mean(-1, keepdims=True)
        h = (h - m) / jnp.sqrt(v + LN_EPS) * p["gamma"] + p["beta"]
        h = jnp.maximum(h, 0.0)
        return h @ p["w2"] + p["b2"]

    ok = True
    for k, v in out.items():
        ref = _ref_head(clip_features, params[k])
        ok = ok and bool(jnp.allclose(v, ref, atol=1e-4, rtol=1e-4))
        ok = ok and v.shape == (batch, attribute_dims[k])

    # Also exercise the other category path once.
    out2 = category_aware_attribute_predictor(clip_features, "pants", packed)
    for k, v in out2.items():
        jax.block_until_ready(v)
        ref = _ref_head(clip_features, params[k])
        ok = ok and bool(jnp.allclose(v, ref, atol=1e-4, rtol=1e-4))
        ok = ok and v.shape == (batch, attribute_dims[k])

    if ok:
        print("KERNEL_OK")
</pallas_src>

<mosaic_0001>
module attributes {stable_mosaic.version = 11 : i64} {
  func.func @_fused_heads_kernel(%arg0: i32, %arg1: memref<8x32xf32, #tpu.memory_space<vmem>>, %arg2: memref<32x96xf32, #tpu.memory_space<vmem>>, %arg3: memref<3x96xf32, #tpu.memory_space<vmem>>, %arg4: memref<96x96xf32, #tpu.memory_space<vmem>>, %arg5: memref<96x128xf32, #tpu.memory_space<vmem>>, %arg6: memref<1x128xf32, #tpu.memory_space<vmem>>, %arg7: memref<8x128xf32, #tpu.memory_space<vmem>>) attributes {dimension_semantics = [#tpu.dimension_semantics<parallel>], iteration_bounds = array<i64: 1>, scalar_prefetch = 0 : i64, scratch_operands = 0 : i64, tpu.core_type = #tpu.core_type<tc>, window_params = [{transform_indices = @transform_0, window_bounds = array<i64: 8, 32>}, {pipeline_mode = #tpu.pipeline_mode<synchronous>, transform_indices = @transform_1, window_bounds = array<i64: 32, 96>}, {pipeline_mode = #tpu.pipeline_mode<synchronous>, transform_indices = @transform_2, window_bounds = array<i64: 3, 96>}, {pipeline_mode = #tpu.pipeline_mode<synchronous>, transform_indices = @transform_3, window_bounds = array<i64: 96, 96>}, {pipeline_mode = #tpu.pipeline_mode<synchronous>, transform_indices = @transform_4, window_bounds = array<i64: 96, 128>}, {pipeline_mode = #tpu.pipeline_mode<synchronous>, transform_indices = @transform_5, window_bounds = array<i64: 1, 128>}, {transform_indices = @transform_6, window_bounds = array<i64: 8, 128>}]} {
    %c0 = arith.constant 0 : index
    %c0_0 = arith.constant 0 : index
    %0 = vector.load %arg1[%c0, %c0_0] : memref<8x32xf32, #tpu.memory_space<vmem>>, vector<8x32xf32>
    %c0_1 = arith.constant 0 : index
    %c0_2 = arith.constant 0 : index
    %1 = vector.load %arg2[%c0_1, %c0_2] : memref<32x96xf32, #tpu.memory_space<vmem>>, vector<32x96xf32>
    %cst = arith.constant dense<0.000000e+00> : vector<8x96xf32>
    %2 = tpu.matmul %0, %1, %cst {dimension_numbers = #tpu.dot_dimension_numbers<[1], [0], [0], [1], [0, 0, 1, 1], [], []>} : vector<8x32xf32>, vector<32x96xf32>, vector<8x96xf32> -> vector<8x96xf32>
    %c0_3 = arith.constant 0 : index
    %c0_4 = arith.constant 0 : index
    %3 = vector.load %arg3[%c0_3, %c0_4] : memref<3x96xf32, #tpu.memory_space<vmem>>, vector<3x96xf32>
    %4 = vector.extract_strided_slice %3 {offsets = [0, 0], sizes = [1, 96], strides = [1, 1]} : vector<3x96xf32> to vector<1x96xf32>
    %5 = vector.broadcast %4 : vector<1x96xf32> to vector<8x96xf32>
    %6 = arith.addf %2, %5 : vector<8x96xf32>
    %7 = arith.mulf %6, %6 : vector<8x96xf32>
    %8 = tpu.concatenate %6, %7 in 0 : vector<8x96xf32>, vector<8x96xf32> -> vector<16x96xf32>
    %c0_5 = arith.constant 0 : index
    %c0_6 = arith.constant 0 : index
    %9 = vector.load %arg4[%c0_5, %c0_6] : memref<96x96xf32, #tpu.memory_space<vmem>>, vector<96x96xf32>
    %cst_7 = arith.constant dense<0.000000e+00> : vector<16x96xf32>
    %10 = tpu.matmul %8, %9, %cst_7 {dimension_numbers = #tpu.dot_dimension_numbers<[1], [0], [0], [1], [0, 0, 1, 1], [], []>} : vector<16x96xf32>, vector<96x96xf32>, vector<16x96xf32> -> vector<16x96xf32>
    %11 = vector.extract_strided_slice %10 {offsets = [0, 0], sizes = [8, 96], strides = [1, 1]} : vector<16x96xf32> to vector<8x96xf32>
    %12 = vector.extract_strided_slice %10 {offsets = [8, 0], sizes = [8, 96], strides = [1, 1]} : vector<16x96xf32> to vector<8x96xf32>
    %13 = arith.mulf %11, %11 : vector<8x96xf32>
    %14 = arith.subf %12, %13 : vector<8x96xf32>
    %15 = arith.subf %6, %11 : vector<8x96xf32>
    %cst_8 = arith.constant 9.99999974E-6 : f32
    %16 = vector.broadcast %cst_8 : f32 to vector<8x96xf32>
    %17 = arith.addf %14, %16 : vector<8x96xf32>
    %18 = math.rsqrt %17 : vector<8x96xf32>
    %19 = arith.mulf %15, %18 : vector<8x96xf32>
    %20 = vector.extract_strided_slice %3 {offsets = [1, 0], sizes = [1, 96], strides = [1, 1]} : vector<3x96xf32> to vector<1x96xf32>
    %21 = vector.broadcast %20 : vector<1x96xf32> to vector<8x96xf32>
    %22 = arith.mulf %19, %21 : vector<8x96xf32>
    %23 = vector.extract_strided_slice %3 {offsets = [2, 0], sizes = [1, 96], strides = [1, 1]} : vector<3x96xf32> to vector<1x96xf32>
    %24 = vector.broadcast %23 : vector<1x96xf32> to vector<8x96xf32>
    %25 = arith.addf %22, %24 : vector<8x96xf32>
    %cst_9 = arith.constant 0.000000e+00 : f32
    %26 = vector.broadcast %cst_9 : f32 to vector<8x96xf32>
    %27 = arith.maximumf %25, %26 : vector<8x96xf32>
    %c0_10 = arith.constant 0 : index
    %c0_11 = arith.constant 0 : index
    %28 = vector.load %arg5[%c0_10, %c0_11] : memref<96x128xf32, #tpu.memory_space<vmem>>, vector<96x128xf32>
    %cst_12 = arith.constant dense<0.000000e+00> : vector<8x128xf32>
    %29 = tpu.matmul %27, %28, %cst_12 {dimension_numbers = #tpu.dot_dimension_numbers<[1], [0], [0], [1], [0, 0, 1, 1], [], []>} : vector<8x96xf32>, vector<96x128xf32>, vector<8x128xf32> -> vector<8x128xf32>
    %c0_13 = arith.constant 0 : index
    %c0_14 = arith.constant 0 : index
    %30 = vector.load %arg6[%c0_13, %c0_14] : memref<1x128xf32, #tpu.memory_space<vmem>>, vector<1x128xf32>
    %31 = vector.broadcast %30 : vector<1x128xf32> to vector<8x128xf32>
    %32 = arith.addf %29, %31 : vector<8x128xf32>
    %c0_15 = arith.constant 0 : index
    %c0_16 = arith.constant 0 : index
    %33 = vector.load %arg7[%c0_15, %c0_16] : memref<8x128xf32, #tpu.memory_space<vmem>>, vector<8x128xf32>
    tpu.vector_store %arg7[%c0_15, %c0_16], %32 {strides = array<i32>} : memref<8x128xf32, #tpu.memory_space<vmem>>, vector<8x128xf32>,
    return
  }
  func.func @transform_0(%arg0: i32) -> (i32, i32) {
    %c0_i32 = arith.constant 0 : i32
    %c0_i32_0 = arith.constant 0 : i32
    return %arg0, %c0_i32 : i32, i32
  }
  func.func @transform_1(%arg0: i32) -> (i32, i32) {
    %c0_i32 = arith.constant 0 : i32
    %c0_i32_0 = arith.constant 0 : i32
    %c0_i32_1 = arith.constant 0 : i32
    return %c0_i32, %c0_i32_0 : i32, i32
  }
  func.func @transform_2(%arg0: i32) -> (i32, i32) {
    %c0_i32 = arith.constant 0 : i32
    %c0_i32_0 = arith.constant 0 : i32
    %c0_i32_1 = arith.constant 0 : i32
    return %c0_i32, %c0_i32_0 : i32, i32
  }
  func.func @transform_3(%arg0: i32) -> (i32, i32) {
    %c0_i32 = arith.constant 0 : i32
    %c0_i32_0 = arith.constant 0 : i32
    %c0_i32_1 = arith.constant 0 : i32
    return %c0_i32, %c0_i32_0 : i32, i32
  }
  func.func @transform_4(%arg0: i32) -> (i32, i32) {
    %c0_i32 = arith.constant 0 : i32
    %c0_i32_0 = arith.constant 0 : i32
    %c0_i32_1 = arith.constant 0 : i32
    return %c0_i32, %c0_i32_0 : i32, i32
  }
  func.func @transform_5(%arg0: i32) -> (i32, i32) {
    %c0_i32 = arith.constant 0 : i32
    %c0_i32_0 = arith.constant 0 : i32
    %c0_i32_1 = arith.constant 0 : i32
    return %c0_i32, %c0_i32_0 : i32, i32
  }
  func.func @transform_6(%arg0: i32) -> (i32, i32) {
    %c0_i32 = arith.constant 0 : i32
    %c0_i32_0 = arith.constant 0 : i32
    return %arg0, %c0_i32 : i32, i32
  }
}

</mosaic_0001>

<llo_original>
// kernel: _predict_slab.1
$region0: #{_predict_slab.1}
  #allocation0 [shape = 'u32[]', space=smem, size = 0x4, offset = 0x4, fixed_abs, tag = 'smem constant byte address 0x4 - core index']
  #allocation1 [shape = 'u32[144,128]{1,0:T(1,128)}', space=vmem, size = 0x12000, scoped, tag = 'internal scratch']
  %s0 = inlined_call_operand.vmem [shape: f32[8,32], index: 0, kind: input, shape index: {}]
  %s1 = inlined_call_operand.hbm [shape: f32[32,96], index: 1, kind: input, shape index: {}]
  %s2 = inlined_call_operand.vmem [shape: f32[3,96], index: 2, kind: input, shape index: {}]
  %s3 = inlined_call_operand.hbm [shape: f32[96,96], index: 3, kind: input, shape index: {}]
  %s4 = inlined_call_operand.hbm [shape: f32[96,128], index: 4, kind: input, shape index: {}]
  %s5 = inlined_call_operand.vmem [shape: f32[1,128], index: 5, kind: input, shape index: {}]
  %s6 = inlined_call_operand.vmem [shape: f32[8,128], index: 6, kind: output, shape index: {}]
  %s7 = sld [smem:[#allocation0]]
  $region46: #{_predict_slab.1} parent=0
    _
  %s9 = ssub.s32 1, %s7
  %s10 = scalar_select 0, %s9, %s7
  $region1: #{_predict_slab.1} parent=0
    #allocation2 [shape = 'u8[16384]{0}', space=vmem, size = 0x4000, scoped, tag = 'input window, operand 1, single buffered']
    #allocation3 [shape = 's32[1]{0}', space=sflag, size = 0x4, scoped, tag = 'scoped memory for _predict_slab.1']
    #allocation4 [shape = 'u8[49152]{0}', space=vmem, size = 0xc000, scoped, tag = 'input window, operand 3, single buffered']
    #allocation5 [shape = 's32[1]{0}', space=sflag, size = 0x4, scoped, tag = 'scoped memory for _predict_slab.1']
    #allocation6 [shape = 'u8[49152]{0}', space=vmem, size = 0xc000, scoped, tag = 'input window, operand 4, single buffered']
    %11 = vsyncpa [#allocation3], 0
    %12 = vsyncpa [#allocation5], 0
    // Predicated region
    $region2: #{_predict_slab.1} parent=1 // pred_check
      _
    $region3: #{_predict_slab.1} parent=1 // pred_check_branch
      %14 = sbr.rel (0) target = $region5
    $region4: #{_predict_slab.1} parent=1 // pred_region
      _
    $region5: #{_predict_slab.1} parent=1 // pred_fallthru
      _
    // Predicated region
    $region6: #{_predict_slab.1} parent=1 // pred_check
      _
    $region7: #{_predict_slab.1} parent=1 // pred_check_branch
      %16 = sbr.rel (0) target = $region9
    $region8: #{_predict_slab.1} parent=1 // pred_region
      %s18 = ssub.s32 512, 512
      %19 = vsyncadd [#allocation3], %s18
      %s20 = sshll.u32 [#allocation2], 4
      %s21 = int_to_ptr.vmem [resolvable:$true] %s20
      %26 = dma.hbm_to_vmem [thread:$0]  %s1, 512, %s21, [#allocation3], 128, 128, 8
    $region9: #{_predict_slab.1} parent=1 // pred_fallthru
      _
    // Predicated region
    $region10: #{_predict_slab.1} parent=1 // pred_check
      _
    $region11: #{_predict_slab.1} parent=1 // pred_check_branch
      %28 = sbr.rel (0) target = $region13
    $region12: #{_predict_slab.1} parent=1 // pred_region
      _
    $region13: #{_predict_slab.1} parent=1 // pred_fallthru
      _
    // Predicated region
    $region14: #{_predict_slab.1} parent=1 // pred_check
      _
    $region15: #{_predict_slab.1} parent=1 // pred_check_branch
      %30 = sbr.rel (0) target = $region17
    $region16: #{_predict_slab.1} parent=1 // pred_region
      %s32 = ssub.s32 1536, 1536
      %33 = vsyncadd [#allocation5], %s32
      %s34 = sshll.u32 [#allocation4], 4
      %s35 = int_to_ptr.vmem [resolvable:$true] %s34
      %40 = dma.hbm_to_vmem [thread:$0]  %s3, 1536, %s35, [#allocation5], 128, 128, 8
    $region17: #{_predict_slab.1} parent=1 // pred_fallthru
      _
    // Predicated region
    $region18: #{_predict_slab.1} parent=1 // pred_check
      _
    $region19: #{_predict_slab.1} parent=1 // pred_check_branch
      %42 = sbr.rel (0) target = $region21
    $region20: #{_predict_slab.1} parent=1 // pred_region
      %s44 = ssub.s32 1536, 1536
      %45 = vsyncadd [#allocation5], %s44
      %s46 = sshll.u32 [#allocation6], 4
      %s47 = int_to_ptr.vmem [resolvable:$true] %s46
      %52 = dma.hbm_to_vmem [thread:$0]  %s4, 1536, %s47, [#allocation5], 128, 128, 8
    $region21: #{_predict_slab.1} parent=1 // pred_fallthru
      _
    // Predicated region
    $region22: #{_predict_slab.1} parent=1 // pred_check
      _
    $region23: #{_predict_slab.1} parent=1 // pred_check_branch
      %54 = sbr.rel (0) target = $region25
    $region24: #{_predict_slab.1} parent=1 // pred_region
      _
    $region25: #{_predict_slab.1} parent=1 // pred_fallthru
      _
    // Predicated region
    $region26: #{_predict_slab.1} parent=1 // pred_check
      _
    $region27: #{_predict_slab.1} parent=1 // pred_check_branch
      %56 = sbr.rel (0) target = $region29
    $region28: #{_predict_slab.1} parent=1 // pred_region
      %57 = dma.done [#allocation3], 512
    $region29: #{_predict_slab.1} parent=1 // pred_fallthru
      _
    // Predicated region
    $region30: #{_predict_slab.1} parent=1 // pred_check
      _
    $region31: #{_predict_slab.1} parent=1 // pred_check_branch
      %59 = sbr.rel (0) target = $region33
    $region32: #{_predict_slab.1} parent=1 // pred_region
      %60 = dma.done [#allocation5], 1536
    $region33: #{_predict_slab.1} parent=1 // pred_fallthru
      _
    // Predicated region
    $region34: #{_predict_slab.1} parent=1 // pred_check
      _
    $region35: #{_predict_slab.1} parent=1 // pred_check_branch
      %62 = sbr.rel (0) target = $region37
    $region36: #{_predict_slab.1} parent=1 // pred_region
      %63 = dma.done [#allocation5], 1536
    $region37: #{_predict_slab.1} parent=1 // pred_fallthru
      _
    %v64 = vld [vmem:[%s0] sm:$0xff]
    %v65 = vld [vmem:[#allocation2] sm:$0xff]
    %v66 = vld [vmem:[#allocation2 + $0x8] sm:$0xff]
    %v67 = vld [vmem:[#allocation2 + $0x10] sm:$0xff]
    %v68 = vld [vmem:[#allocation2 + $0x18] sm:$0xff]
    %v69 = vld [vmem:[%s2] sm:$0x7]
    %v70 = vlaneseq
    %v71 = vshrl.u32 %v70, 7
    %v72 = vsub.s32 0, %v71
    %v73 = vrot.slane %v69, %v72
    %vm74 = vcmask 261120
    %v76 = vsel %vm74, %v64, 0
    %78 = vmatprep.subr.mxu0 0.0
    %79 = vmatpush1.msra.mxu0 %v65
    %80 = vmatprep.subr.mxu0 0.0
    %81 = vmatpush1.msra.mxu0 %v66
    %82 = vmatprep.subr.mxu0 0.0
    %83 = vmatpush1.msra.mxu0 %v67
    %84 = vmatprep.subr.mxu0 0.0
    %85 = vmatpush1.msra.mxu0 %v68
    %86 = vmatprep.subr.mxu0 0.0
    %87 = vmatpush1.msra.mxu0 0.0
    %88 = vmatprep.subr.mxu0 0.0
    %89 = vmatpush1.msra.mxu0 0.0
    %90 = vmatprep.subr.mxu0 0.0
    %91 = vmatpush1.msra.mxu0 0.0
    %92 = vmatprep.subr.mxu0 0.0
    %93 = vmatpush1.msra.mxu0 0.0
    %94 = vmatprep.subr.mxu0 0.0
    %95 = vmatpush1.msra.mxu0 0.0
    %96 = vmatprep.subr.mxu0 0.0
    %97 = vmatpush1.msra.mxu0 0.0
    %98 = vmatprep.subr.mxu0 0.0
    %99 = vmatpush1.msra.mxu0 0.0
    %100 = vmatprep.subr.mxu0 0.0
    %101 = vmatpush1.msra.mxu0 0.0
    %102 = vmatprep.subr.mxu0 0.0
    %103 = vmatpush1.msra.mxu0 0.0
    %104 = vmatprep.subr.mxu0 0.0
    %105 = vmatpush1.msra.mxu0 0.0
    %106 = vmatprep.subr.mxu0 0.0
    %107 = vmatpush1.msra.mxu0 0.0
    %108 = vmatprep.subr.mxu0 0.0
    %109 = vmatpush1.msra.mxu0 0.0
    %110 = vmatprep.subr.mxu0 0.0
    %111 = vmatpush1.msra.mxu0 0.0
    %112 = vmatprep.subr.mxu0 0.0
    %113 = vmatpush1.msra.mxu0 0.0
    %114 = vmatprep.subr.mxu0 0.0
    %115 = vmatpush1.msra.mxu0 0.0
    %116 = vmatprep.subr.mxu0 0.0
    %117 = vmatpush1.msra.mxu0 0.0
    %118 = vmatprep.subr.mxu0 0.0
    %119 = vmatpush1.msra.mxu0 0.0
    %120 = vmatprep.subr.mxu0 0.0
    %121 = vmatpush1.msra.mxu0 0.0
    %122 = vmatprep.subr.mxu0 0.0
    %123 = vmatpush1.msra.mxu0 0.0
    %124 = vmatprep.subr.mxu0 0.0
    %125 = vmatpush1.msra.mxu0 0.0
    %126 = vmatprep.subr.mxu0 0.0
    %127 = vmatpush1.msra.mxu0 0.0
    %128 = vmatprep.subr.mxu0 0.0
    %129 = vmatpush1.msra.mxu0 0.0
    %130 = vmatprep.subr.mxu0 0.0
    %131 = vmatpush1.msra.mxu0 0.0
    %132 = vmatprep.subr.mxu0 0.0
    %133 = vmatpush1.msra.mxu0 0.0
    %134 = vmatprep.subr.mxu0 0.0
    %135 = vmatpush1.msra.mxu0 0.0
    %136 = vmatprep.subr.mxu0 0.0
    %137 = vmatpush1.msra.mxu0 0.0
    %138 = vmatprep.subr.mxu0 0.0
    %139 = vmatpush1.msra.mxu0 0.0
    %140 = vmatprep.subr.mxu0 0.0
    %141 = vmatpush1.msra.mxu0 0.0
    %142 = vmatprep.mubr.f32.mxu0 0.0
    %143 = vmatmul.mubr.f32.gmra.mrb[0].mxu0 %v76
    %v144 = vpop.f32.mrb[0].mxu0
    %v145 = vadd.f32 %v73, %v144
    %v146 = vpop.f32.mrb[0].mxu0
    %147 = vdwg.mxu0
    %v148 = vmul.f32 %v145, %v145
    %v149 = vld [vmem:[#allocation4] sm:$0xff]
    %v150 = vld [vmem:[#allocation4 + $0x8] sm:$0xff]
    %v151 = vld [vmem:[#allocation4 + $0x10] sm:$0xff]
    %v152 = vld [vmem:[#allocation4 + $0x18] sm:$0xff]
    %v153 = vld [vmem:[#allocation4 + $0x20] sm:$0xff]
    %v154 = vld [vmem:[#allocation4 + $0x28] sm:$0xff]
    %v155 = vld [vmem:[#allocation4 + $0x30] sm:$0xff]
    %v156 = vld [vmem:[#allocation4 + $0x38] sm:$0xff]
    %v157 = vld [vmem:[#allocation4 + $0x40] sm:$0xff]
    %v158 = vld [vmem:[#allocation4 + $0x48] sm:$0xff]
    %v159 = vld [vmem:[#allocation4 + $0x50] sm:$0xff]
    %v160 = vld [vmem:[#allocation4 + $0x58] sm:$0xff]
    %vm161 = vcmask 785408
    %v163 = vsel %vm161, %v145, 0
    %v166 = vsel %vm161, %v148, 0
    %168 = vmatprep.subr.mxu0 0.0
    %169 = vmatpush1.msra.mxu0 %v149
    %170 = vmatprep.subr.mxu0 0.0
    %171 = vmatpush1.msra.mxu0 %v150
    %172 = vmatprep.subr.mxu0 0.0
    %173 = vmatpush1.msra.mxu0 %v151
    %174 = vmatprep.subr.mxu0 0.0
    %175 = vmatpush1.msra.mxu0 %v152
    %176 = vmatprep.subr.mxu0 0.0
    %177 = vmatpush1.msra.mxu0 %v153
    %178 = vmatprep.subr.mxu0 0.0
    %179 = vmatpush1.msra.mxu0 %v154
    %180 = vmatprep.subr.mxu0 0.0
    %181 = vmatpush1.msra.mxu0 %v155
    %182 = vmatprep.subr.mxu0 0.0
    %183 = vmatpush1.msra.mxu0 %v156
    %184 = vmatprep.subr.mxu0 0.0
    %185 = vmatpush1.msra.mxu0 %v157
    %186 = vmatprep.subr.mxu0 0.0
    %187 = vmatpush1.msra.mxu0 %v158
    %188 = vmatprep.subr.mxu0 0.0
    %189 = vmatpush1.msra.mxu0 %v159
    %190 = vmatprep.subr.mxu0 0.0
    %191 = vmatpush1.msra.mxu0 %v160
    %192 = vmatprep.subr.mxu0 0.0
    %193 = vmatpush1.msra.mxu0 0.0
    %194 = vmatprep.subr.mxu0 0.0
    %195 = vmatpush1.msra.mxu0 0.0
    %196 = vmatprep.subr.mxu0 0.0
    %197 = vmatpush1.msra.mxu0 0.0
    %198 = vmatprep.subr.mxu0 0.0
    %199 = vmatpush1.msra.mxu0 0.0
    %200 = vmatprep.subr.mxu0 0.0
    %201 = vmatpush1.msra.mxu0 0.0
    %202 = vmatprep.subr.mxu0 0.0
    %203 = vmatpush1.msra.mxu0 0.0
    %204 = vmatprep.subr.mxu0 0.0
    %205 = vmatpush1.msra.mxu0 0.0
    %206 = vmatprep.subr.mxu0 0.0
    %207 = vmatpush1.msra.mxu0 0.0
    %208 = vmatprep.subr.mxu0 0.0
    %209 = vmatpush1.msra.mxu0 0.0
    %210 = vmatprep.subr.mxu0 0.0
    %211 = vmatpush1.msra.mxu0 0.0
    %212 = vmatprep.subr.mxu0 0.0
    %213 = vmatpush1.msra.mxu0 0.0
    %214 = vmatprep.subr.mxu0 0.0
    %215 = vmatpush1.msra.mxu0 0.0
    %216 = vmatprep.subr.mxu0 0.0
    %217 = vmatpush1.msra.mxu0 0.0
    %218 = vmatprep.subr.mxu0 0.0
    %219 = vmatpush1.msra.mxu0 0.0
    %220 = vmatprep.subr.mxu0 0.0
    %221 = vmatpush1.msra.mxu0 0.0
    %222 = vmatprep.subr.mxu0 0.0
    %223 = vmatpush1.msra.mxu0 0.0
    %224 = vmatprep.subr.mxu0 0.0
    %225 = vmatpush1.msra.mxu0 0.0
    %226 = vmatprep.subr.mxu0 0.0
    %227 = vmatpush1.msra.mxu0 0.0
    %228 = vmatprep.subr.mxu0 0.0
    %229 = vmatpush1.msra.mxu0 0.0
    %230 = vmatprep.subr.mxu0 0.0
    %231 = vmatpush1.msra.mxu0 0.0
    %232 = vmatprep.mubr.f32.mxu0 0.0
    %233 = vmatmul.mubr.f32.gmra.mrb[0].mxu0 %v163
    %v234 = vpop.f32.mrb[0].mxu0
    %v235 = vadd.f32 0.0, %v234
    %v236 = vpop.f32.mrb[0].mxu0
    %237 = vmatprep.mubr.f32.mxu0 0.0
    %238 = vmatmul.mubr.f32.gmra.mrb[0].mxu0 %v166
    %v239 = vpop.f32.mrb[0].mxu0
    %v240 = vadd.f32 0.0, %v239
    %v241 = vpop.f32.mrb[0].mxu0
    %242 = vdwg.mxu0
    %v243 = vmul.f32 %v235, %v235
    %v244 = vsub.f32 %v240, %v243
    %v245 = vsub.f32 %v145, %v235
    %v246 = vadd.f32 %v244, 1e-05
    %v247 = vrsqrt.pop %v246
    %v248 = vmul.f32 %v245, %v247
    %v249 = vlaneseq
    %v250 = vshrl.u32 %v249, 7
    %v251 = vsub.s32 1, %v250
    %v252 = vrot.slane %v69, %v251
    %v253 = vmul.f32 %v248, %v252
    %v254 = vlaneseq
    %v255 = vshrl.u32 %v254, 7
    %v256 = vsub.s32 2, %v255
    %v257 = vrot.slane %v69, %v256
    %v258 = vadd.f32 %v253, %v257
    %v259 = vmax.f32 %v258, 0.0
    %v260 = vld [vmem:[#allocation6] sm:$0xff]
    %v261 = vld [vmem:[#allocation6 + $0x8] sm:$0xff]
    %v262 = vld [vmem:[#allocation6 + $0x10] sm:$0xff]
    %v263 = vld [vmem:[#allocation6 + $0x18] sm:$0xff]
    %v264 = vld [vmem:[#allocation6 + $0x20] sm:$0xff]
    %v265 = vld [vmem:[#allocation6 + $0x28] sm:$0xff]
    %v266 = vld [vmem:[#allocation6 + $0x30] sm:$0xff]
    %v267 = vld [vmem:[#allocation6 + $0x38] sm:$0xff]
    %v268 = vld [vmem:[#allocation6 + $0x40] sm:$0xff]
    %v269 = vld [vmem:[#allocation6 + $0x48] sm:$0xff]
    %v270 = vld [vmem:[#allocation6 + $0x50] sm:$0xff]
    %v271 = vld [vmem:[#allocation6 + $0x58] sm:$0xff]
    %v272 = vld [vmem:[%s5] sm:$0x1]
    %v274 = vlaneseq
    %v275 = vshrl.u32 %v274, 7
    %v276 = vsub.s32 0, %v275
    %v277 = vrot.slane %v272, %v276
    %v280 = vsel %vm161, %v259, 0
    %282 = vmatprep.subr.mxu0 0.0
    %283 = vmatpush1.msra.mxu0 %v260
    %284 = vmatprep.subr.mxu0 0.0
    %285 = vmatpush1.msra.mxu0 %v261
    %286 = vmatprep.subr.mxu0 0.0
    %287 = vmatpush1.msra.mxu0 %v262
    %288 = vmatprep.subr.mxu0 0.0
    %289 = vmatpush1.msra.mxu0 %v263
    %290 = vmatprep.subr.mxu0 0.0
    %291 = vmatpush1.msra.mxu0 %v264
    %292 = vmatprep.subr.mxu0 0.0
    %293 = vmatpush1.msra.mxu0 %v265
    %294 = vmatprep.subr.mxu0 0.0
    %295 = vmatpush1.msra.mxu0 %v266
    %296 = vmatprep.subr.mxu0 0.0
    %297 = vmatpush1.msra.mxu0 %v267
    %298 = vmatprep.subr.mxu0 0.0
    %299 = vmatpush1.msra.mxu0 %v268
    %300 = vmatprep.subr.mxu0 0.0
    %301 = vmatpush1.msra.mxu0 %v269
    %302 = vmatprep.subr.mxu0 0.0
    %303 = vmatpush1.msra.mxu0 %v270
    %304 = vmatprep.subr.mxu0 0.0
    %305 = vmatpush1.msra.mxu0 %v271
    %306 = vmatprep.subr.mxu0 0.0
    %307 = vmatpush1.msra.mxu0 0.0
    %308 = vmatprep.subr.mxu0 0.0
    %309 = vmatpush1.msra.mxu0 0.0
    %310 = vmatprep.subr.mxu0 0.0
    %311 = vmatpush1.msra.mxu0 0.0
    %312 = vmatprep.subr.mxu0 0.0
    %313 = vmatpush1.msra.mxu0 0.0
    %314 = vmatprep.subr.mxu0 0.0
    %315 = vmatpush1.msra.mxu0 0.0
    %316 = vmatprep.subr.mxu0 0.0
    %317 = vmatpush1.msra.mxu0 0.0
    %318 = vmatprep.subr.mxu0 0.0
    %319 = vmatpush1.msra.mxu0 0.0
    %320 = vmatprep.subr.mxu0 0.0
    %321 = vmatpush1.msra.mxu0 0.0
    %322 = vmatprep.subr.mxu0 0.0
    %323 = vmatpush1.msra.mxu0 0.0
    %324 = vmatprep.subr.mxu0 0.0
    %325 = vmatpush1.msra.mxu0 0.0
    %326 = vmatprep.subr.mxu0 0.0
    %327 = vmatpush1.msra.mxu0 0.0
    %328 = vmatprep.subr.mxu0 0.0
    %329 = vmatpush1.msra.mxu0 0.0
    %330 = vmatprep.subr.mxu0 0.0
    %331 = vmatpush1.msra.mxu0 0.0
    %332 = vmatprep.subr.mxu0 0.0
    %333 = vmatpush1.msra.mxu0 0.0
    %334 = vmatprep.subr.mxu0 0.0
    %335 = vmatpush1.msra.mxu0 0.0
    %336 = vmatprep.subr.mxu0 0.0
    %337 = vmatpush1.msra.mxu0 0.0
    %338 = vmatprep.subr.mxu0 0.0
    %339 = vmatpush1.msra.mxu0 0.0
    %340 = vmatprep.subr.mxu0 0.0
    %341 = vmatpush1.msra.mxu0 0.0
    %342 = vmatprep.subr.mxu0 0.0
    %343 = vmatpush1.msra.mxu0 0.0
    %344 = vmatprep.subr.mxu0 0.0
    %345 = vmatpush1.msra.mxu0 0.0
    %346 = vmatprep.mubr.f32.mxu0 0.0
    %347 = vmatmul.mubr.f32.gmra.mrb[0].mxu0 %v280
    %v348 = vpop.f32.mrb[0].mxu0
    %v349 = vadd.f32 %v277, %v348
    %v350 = vpop.f32.mrb[0].mxu0
    %351 = vdwg.mxu0
    %352 = vst [vmem:[%s6] sm:$0xff] %v349
    // Predicated region
    $region38: #{_predict_slab.1} parent=1 // pred_check
      _
    $region39: #{_predict_slab.1} parent=1 // pred_check_branch
      %354 = sbr.rel (0) target = $region41
    $region40: #{_predict_slab.1} parent=1 // pred_region
      _
    $region41: #{_predict_slab.1} parent=1 // pred_fallthru
      _
    // Predicated region
    $region42: #{_predict_slab.1} parent=1 // pred_check
      _
    $region43: #{_predict_slab.1} parent=1 // pred_check_branch
      %356 = sbr.rel (0) target = $region45
    $region44: #{_predict_slab.1} parent=1 // pred_region
      _
    $region45: #{_predict_slab.1} parent=1 // pred_fallthru
      _
    %357 = vsyncpa [#allocation3], 1
    %358 = vsyncpa [#allocation5], 1

</llo_original>
